<compile_context>
chip_gen: v7x
topology: tpu7x:2x2x1
jax: 0.10.0
libtpu: 0.0.40
codegen_flags: <defaults>
</compile_context>

<pallas_src>
import jax
import jax.numpy as jnp
from jax.experimental import pallas as pl
from jax.experimental.pallas import tpu as pltpu

NEG_BIAS = -1e30                    # finite "minus infinity" for padded labels
_VMEM_BUDGET = 40 * 1024 * 1024     # conservative vs v7x's 64 MiB physical VMEM


def _round_up(x, m):
    return ((x + m - 1) // m) * m


def _cdiv(a, b):
    return (a + b - 1) // b


# ---------------------------------------------------------------------------
# Kernels
# ---------------------------------------------------------------------------
def _fused_kernel(x_ref, w_ref, b_ref, o_ref):
    """Whole contraction in one block: grid = (batch_tiles,)."""
    logits = jnp.dot(x_ref[...].astype(jnp.bfloat16), w_ref[...],
                     preferred_element_type=jnp.float32) + b_ref[...]
    m = jnp.max(logits, axis=-1, keepdims=True)
    shifted = logits - m
    lse = jnp.log(jnp.sum(jnp.exp(shifted), axis=-1, keepdims=True))
    o_ref[...] = (shifted - lse).astype(o_ref.dtype)


def _acc_kernel(x_ref, w_ref, b_ref, o_ref, acc_ref):
    """K-tiled reduction: grid = (batch_tiles, k_tiles), k innermost."""
    k = pl.program_id(1)
    partial = jnp.dot(x_ref[...].astype(jnp.bfloat16), w_ref[...],
                      preferred_element_type=jnp.float32)

    @pl.when(k == 0)
    def _first():
        acc_ref[...] = partial

    @pl.when(k > 0)
    def _accum():
        acc_ref[...] += partial

    @pl.when(k == pl.num_programs(1) - 1)
    def _finalize():
        logits = acc_ref[...] + b_ref[...]       # bias added exactly once
        m = jnp.max(logits, axis=-1, keepdims=True)
        shifted = logits - m
        lse = jnp.log(jnp.sum(jnp.exp(shifted), axis=-1, keepdims=True))
        o_ref[...] = (shifted - lse).astype(o_ref.dtype)


# ---------------------------------------------------------------------------
# Tiling plan
# ---------------------------------------------------------------------------
def _vmem_estimate(tile_b, tile_k, l_pad, x_itemsize):
    x_b = 2 * tile_b * tile_k * x_itemsize       # double-buffered x block
    w_b = 2 * tile_k * l_pad * 2                 # double-buffered W.T block (bf16)
    o_b = 2 * tile_b * l_pad * 4                 # double-buffered out block
    a_b = tile_b * l_pad * 4                     # f32 accumulator scratch
    return x_b + w_b + o_b + a_b


def _plan(B, V, L, x_itemsize, max_tile_b=1024, max_tile_k=2048):
    """Pick (tile_b, n_b, tile_k, n_k, L_pad, vmem_est) with minimal padding."""
    l_pad = _round_up(L, 128)
    while True:
        v128 = _round_up(V, 128)
        n_k = _cdiv(v128, max_tile_k)
        tile_k = _round_up(_cdiv(v128, n_k), 128)

        b8 = _round_up(B, 8)
        n_b = _cdiv(b8, max_tile_b)
        if n_b == 1 and b8 >= 16:
            n_b = 2              # v7x: give the "parallel" axis >=2 tiles (2 TCs)
        tile_b = _round_up(_cdiv(b8, n_b), 8)

        est = _vmem_estimate(tile_b, tile_k, l_pad, x_itemsize)
        if est <= _VMEM_BUDGET or (max_tile_b <= 256 and max_tile_k <= 512):
            # TODO(synk): tile the label axis (L) as well if n_labels ever gets
            # large enough (L_pad >= ~2-4k) that this floor still busts VMEM.
            return tile_b, n_b, tile_k, n_k, l_pad, est
        if max_tile_k > 512:
            max_tile_k //= 2
        else:
            max_tile_b //= 2


# ---------------------------------------------------------------------------
# Forward
# ---------------------------------------------------------------------------
def classifier_forward(x, w, b):
    """log_softmax(x @ w.T + b, axis=1).

    x: (B, V)  -- input vectors (batch, vocab_size); streamed in native dtype.
    w: (L, V)  -- nn.Linear weight, PyTorch layout (n_labels, vocab_size).
    b: (L,)    -- nn.Linear bias.
    returns (B, L) float32.
    """
    B, V = x.shape
    L = w.shape[0]

    tile_b, n_b, tile_k, n_k, L_pad, est = _plan(B, V, L, x.dtype.itemsize)
    B_pad = n_b * tile_b
    V_pad = n_k * tile_k

    # x: only materialize a padded copy when strictly necessary (ragged B or V).
    if B_pad != B or V_pad != V:
        x_p = jnp.pad(x, ((0, B_pad - B), (0, V_pad - V)))
    else:
        x_p = x

    # W.T padded + cast to bf16 (one-time, small vs. the x stream).
    w_t_p = jnp.zeros((V_pad, L_pad), jnp.bfloat16).at[:V, :L].set(
        jnp.transpose(w).astype(jnp.bfloat16))
    # Bias: padded label columns get a huge negative value -> exp() underflows to 0.
    b_p = jnp.full((1, L_pad), NEG_BIAS, jnp.float32).at[0, :L].set(
        b.astype(jnp.float32))

    vmem_limit = min(56 << 20, max(32 << 20, est + (8 << 20)))

    if n_k == 1:
        # Whole contraction resident: W.T fetched once (constant index_map),
        # no accumulator scratch, single "parallel" grid axis.
        out = pl.pallas_call(
            _fused_kernel,
            out_shape=jax.ShapeDtypeStruct((B_pad, L_pad), jnp.float32),
            grid=(n_b,),
            in_specs=[
                pl.BlockSpec((tile_b, tile_k), lambda i: (i, 0)),   # x tile
                pl.BlockSpec((tile_k, L_pad), lambda i: (0, 0)),    # W.T (resident)
                pl.BlockSpec((1, L_pad), lambda i: (0, 0)),         # bias (resident)
            ],
            out_specs=pl.BlockSpec((tile_b, L_pad), lambda i: (i, 0)),
            compiler_params=pltpu.CompilerParams(
                dimension_semantics=("parallel",),
                vmem_limit_bytes=vmem_limit),
        )(x_p, w_t_p, b_p)
    else:
        out = pl.pallas_call(
            _acc_kernel,
            out_shape=jax.ShapeDtypeStruct((B_pad, L_pad), jnp.float32),
            grid=(n_b, n_k),
            in_specs=[
                pl.BlockSpec((tile_b, tile_k), lambda i, k: (i, k)),  # x tile
                pl.BlockSpec((tile_k, L_pad), lambda i, k: (k, 0)),   # W.T k-slab
                pl.BlockSpec((1, L_pad), lambda i, k: (0, 0)),        # bias
            ],
            out_specs=pl.BlockSpec((tile_b, L_pad), lambda i, k: (i, 0)),
            scratch_shapes=[pltpu.VMEM((tile_b, L_pad), jnp.float32)],
            compiler_params=pltpu.CompilerParams(
                dimension_semantics=("parallel", "arbitrary"),
                vmem_limit_bytes=vmem_limit),
        )(x_p, w_t_p, b_p)

    return out[:B, :L]


# ---------------------------------------------------------------------------
# References & tests
# ---------------------------------------------------------------------------
def _reference_f32(x, w, b):
    return jax.nn.log_softmax(x @ w.T + b[None, :], axis=1)


def _reference_bf16_matmul(x, w, b):
    logits = jnp.dot(x.astype(jnp.bfloat16),
                     jnp.transpose(w).astype(jnp.bfloat16),
                     preferred_element_type=jnp.float32) + b[None, :]
    return jax.nn.log_softmax(logits, axis=1)


def _make_case(key, B, V, L):
    kx, kw, kb = jax.random.split(key, 3)
    bound = 1.0 / (V ** 0.5)                 # nn.Linear default init range
    w = jax.random.uniform(kw, (L, V), jnp.float32, -bound, bound)
    b = jax.random.uniform(kb, (L,), jnp.float32, -bound, bound)
    x = jax.random.normal(kx, (B, V), jnp.float32)
    return x, w, b


if __name__ == "__main__":
    key = jax.random.PRNGKey(0)
    k1, k2, k3 = jax.random.split(key, 3)

    # 1) Small shapes consistent with the module: batch=8, vocab=32, labels=16.
    x, w, b = _make_case(k1, 8, 32, 16)
    out = jax.block_until_ready(classifier_forward(x, w, b))
    assert out.shape == (8, 16)
    assert jnp.allclose(out, _reference_bf16_matmul(x, w, b), atol=1e-3, rtol=1e-3)
    assert jnp.allclose(out, _reference_f32(x, w, b), atol=5e-2, rtol=5e-2)

    # 2) Fully aligned shapes (no padding copy, fused kernel, 2 batch tiles).
    x, w, b = _make_case(k2, 256, 1024, 16)
    out = jax.block_until_ready(classifier_forward(x, w, b))
    assert out.shape == (256, 16)
    assert jnp.allclose(out, _reference_bf16_matmul(x, w, b), atol=1e-3, rtol=1e-3)

    # 3) Ragged V (pad path) and V large enough to force the K-tiled kernel.
    x, w, b = _make_case(k3, 1040, 2600, 10)
    out = jax.block_until_ready(classifier_forward(x, w, b))
    assert out.shape == (1040, 10)
    assert jnp.allclose(out, _reference_bf16_matmul(x, w, b), atol=1e-3, rtol=1e-3)
    assert jnp.allclose(out, _reference_f32(x, w, b), atol=1e-1, rtol=1e-1)

    print("KERNEL_OK")
</pallas_src>

<mosaic_0001>
module attributes {stable_mosaic.version = 11 : i64} {
  func.func @_fused_kernel(%arg0: i32, %arg1: memref<8x128xf32, #tpu.memory_space<vmem>>, %arg2: memref<128x128xbf16, #tpu.memory_space<vmem>>, %arg3: memref<1x128xf32, #tpu.memory_space<vmem>>, %arg4: memref<8x128xf32, #tpu.memory_space<vmem>>) attributes {dimension_semantics = [#tpu.dimension_semantics<parallel>], iteration_bounds = array<i64: 1>, scalar_prefetch = 0 : i64, scratch_operands = 0 : i64, tpu.core_type = #tpu.core_type<tc>, window_params = [{transform_indices = @transform_0, window_bounds = array<i64: 8, 128>}, {pipeline_mode = #tpu.pipeline_mode<synchronous>, transform_indices = @transform_1, window_bounds = array<i64: 128, 128>}, {pipeline_mode = #tpu.pipeline_mode<synchronous>, transform_indices = @transform_2, window_bounds = array<i64: 1, 128>}, {transform_indices = @transform_3, window_bounds = array<i64: 8, 128>}]} {
    %c0 = arith.constant 0 : index
    %c0_0 = arith.constant 0 : index
    %0 = vector.load %arg1[%c0, %c0_0] : memref<8x128xf32, #tpu.memory_space<vmem>>, vector<8x128xf32>
    %1 = arith.truncf %0 : vector<8x128xf32> to vector<8x128xbf16>
    %c0_1 = arith.constant 0 : index
    %c0_2 = arith.constant 0 : index
    %2 = vector.load %arg2[%c0_1, %c0_2] : memref<128x128xbf16, #tpu.memory_space<vmem>>, vector<128x128xbf16>
    %cst = arith.constant dense<0.000000e+00> : vector<8x128xf32>
    %3 = tpu.matmul %1, %2, %cst {dimension_numbers = #tpu.dot_dimension_numbers<[1], [0], [0], [1], [0, 0, 1, 1], [], []>} : vector<8x128xbf16>, vector<128x128xbf16>, vector<8x128xf32> -> vector<8x128xf32>
    %c0_3 = arith.constant 0 : index
    %c0_4 = arith.constant 0 : index
    %4 = vector.load %arg3[%c0_3, %c0_4] : memref<1x128xf32, #tpu.memory_space<vmem>>, vector<1x128xf32>
    %5 = vector.broadcast %4 : vector<1x128xf32> to vector<8x128xf32>
    %6 = arith.addf %3, %5 : vector<8x128xf32>
    %cst_5 = arith.constant dense<0xFF800000> : vector<8xf32>
    %7 = vector.multi_reduction <maximumf>, %6, %cst_5 [1] : vector<8x128xf32> to vector<8xf32>
    %8 = vector.shape_cast %7 : vector<8xf32> to vector<8x1xf32>
    %9 = vector.broadcast %8 : vector<8x1xf32> to vector<8x128xf32>
    %10 = arith.subf %6, %9 : vector<8x128xf32>
    %11 = math.exp %10 : vector<8x128xf32>
    %cst_6 = arith.constant dense<0.000000e+00> : vector<8xf32>
    %12 = vector.multi_reduction <add>, %11, %cst_6 [1] : vector<8x128xf32> to vector<8xf32>
    %13 = vector.shape_cast %12 : vector<8xf32> to vector<8x1xf32>
    %14 = math.log %13 : vector<8x1xf32>
    %15 = vector.broadcast %14 : vector<8x1xf32> to vector<8x128xf32>
    %16 = arith.subf %10, %15 : vector<8x128xf32>
    %c0_7 = arith.constant 0 : index
    %c0_8 = arith.constant 0 : index
    %17 = vector.load %arg4[%c0_7, %c0_8] : memref<8x128xf32, #tpu.memory_space<vmem>>, vector<8x128xf32>
    tpu.vector_store %arg4[%c0_7, %c0_8], %16 {strides = array<i32>} : memref<8x128xf32, #tpu.memory_space<vmem>>, vector<8x128xf32>,
    return
  }
  func.func @transform_0(%arg0: i32) -> (i32, i32) {
    %c0_i32 = arith.constant 0 : i32
    %c0_i32_0 = arith.constant 0 : i32
    return %arg0, %c0_i32 : i32, i32
  }
  func.func @transform_1(%arg0: i32) -> (i32, i32) {
    %c0_i32 = arith.constant 0 : i32
    %c0_i32_0 = arith.constant 0 : i32
    %c0_i32_1 = arith.constant 0 : i32
    return %c0_i32, %c0_i32_0 : i32, i32
  }
  func.func @transform_2(%arg0: i32) -> (i32, i32) {
    %c0_i32 = arith.constant 0 : i32
    %c0_i32_0 = arith.constant 0 : i32
    %c0_i32_1 = arith.constant 0 : i32
    return %c0_i32, %c0_i32_0 : i32, i32
  }
  func.func @transform_3(%arg0: i32) -> (i32, i32) {
    %c0_i32 = arith.constant 0 : i32
    %c0_i32_0 = arith.constant 0 : i32
    return %arg0, %c0_i32 : i32, i32
  }
}

</mosaic_0001>

<llo_original>
// kernel: tpu_custom_call.1
$region0: #{tpu_custom_call.1}
  #allocation0 [shape = 'u32[]', space=smem, size = 0x4, offset = 0x4, fixed_abs, tag = 'smem constant byte address 0x4 - core index']
  #allocation1 [shape = 'u32[144,128]{1,0:T(1,128)}', space=vmem, size = 0x12000, scoped, tag = 'internal scratch']
  %s0 = inlined_call_operand.hbm [shape: f32[8,128], index: 0, kind: input, shape index: {}]
  %s1 = inlined_call_operand.hbm [shape: bf16[128,128], index: 1, kind: input, shape index: {}]
  %s2 = inlined_call_operand.vmem [shape: f32[1,128], index: 2, kind: input, shape index: {}]
  %s3 = inlined_call_operand.hbm [shape: f32[8,128], index: 3, kind: output, shape index: {}]
  %s4 = sld [smem:[#allocation0]]
  $region30: #{tpu_custom_call.1} parent=0
    _
  %s6 = ssub.s32 1, %s4
  %s7 = scalar_select 0, %s6, %s4
  $region1: #{tpu_custom_call.1} parent=0
    #allocation2 [shape = 'u8[4096]{0}', space=vmem, size = 0x1000, scoped, tag = 'input window, operand 0, single buffered']
    #allocation3 [shape = 's32[1]{0}', space=sflag, size = 0x4, scoped, tag = 'scoped memory for tpu_custom_call.1']
    #allocation4 [shape = 's32[1]{0}', space=sflag, size = 0x4, scoped, tag = 'scoped memory for tpu_custom_call.1']
    #allocation5 [shape = 'u8[32768]{0}', space=vmem, size = 0x8000, scoped, tag = 'input window, operand 1, single buffered']
    #allocation6 [shape = 's32[1]{0}', space=sflag, size = 0x4, scoped, tag = 'scoped memory for tpu_custom_call.1']
    #allocation7 [shape = 'u8[4096]{0}', space=vmem, size = 0x1000, scoped, tag = 'output window, operand 0, single buffered']
    %8 = vsyncpa [#allocation3], 0
    %9 = vsyncpa [#allocation6], 0
    %10 = vsyncpa [#allocation4], 0
    // Predicated region
    $region2: #{tpu_custom_call.1} parent=1 // pred_check
      _
    $region3: #{tpu_custom_call.1} parent=1 // pred_check_branch
      %12 = sbr.rel (0) target = $region5
    $region4: #{tpu_custom_call.1} parent=1 // pred_region
      %s14 = ssub.s32 128, 128
      %15 = vsyncadd [#allocation3], %s14
      %s17 = sshll.u32 [#allocation2], 4
      %s18 = int_to_ptr.vmem [resolvable:$true] %s17
      %20 = dma.hbm_to_vmem [thread:$0]  %s0, 128, %s18, [#allocation3]
    $region5: #{tpu_custom_call.1} parent=1 // pred_fallthru
      _
    // Predicated region
    $region6: #{tpu_custom_call.1} parent=1 // pred_check
      _
    $region7: #{tpu_custom_call.1} parent=1 // pred_check_branch
      %22 = sbr.rel (0) target = $region9
    $region8: #{tpu_custom_call.1} parent=1 // pred_region
      %s24 = ssub.s32 1024, 1024
      %25 = vsyncadd [#allocation6], %s24
      %s26 = sshll.u32 [#allocation5], 4
      %s27 = int_to_ptr.vmem [resolvable:$true] %s26
      %32 = dma.hbm_to_vmem [thread:$0]  %s1, 1024, %s27, [#allocation6], 64, 64, 4
    $region9: #{tpu_custom_call.1} parent=1 // pred_fallthru
      _
    // Predicated region
    $region10: #{tpu_custom_call.1} parent=1 // pred_check
      _
    $region11: #{tpu_custom_call.1} parent=1 // pred_check_branch
      %34 = sbr.rel (0) target = $region13
    $region12: #{tpu_custom_call.1} parent=1 // pred_region
      _
    $region13: #{tpu_custom_call.1} parent=1 // pred_fallthru
      _
    // Predicated region
    $region14: #{tpu_custom_call.1} parent=1 // pred_check
      _
    $region15: #{tpu_custom_call.1} parent=1 // pred_check_branch
      %36 = sbr.rel (0) target = $region17
    $region16: #{tpu_custom_call.1} parent=1 // pred_region
      %37 = dma.done [#allocation3], 128
    $region17: #{tpu_custom_call.1} parent=1 // pred_fallthru
      _
    // Predicated region
    $region18: #{tpu_custom_call.1} parent=1 // pred_check
      _
    $region19: #{tpu_custom_call.1} parent=1 // pred_check_branch
      %39 = sbr.rel (0) target = $region21
    $region20: #{tpu_custom_call.1} parent=1 // pred_region
      %40 = dma.done [#allocation6], 1024
    $region21: #{tpu_custom_call.1} parent=1 // pred_fallthru
      _
    %v42 = vld [vmem:[#allocation2] sm:$0xff]
    %v43 = vpack.c.bf16 %v42, %v42
    %v44 = vld [vmem:[#allocation5] sm:$0xf]
    %v45 = vld [vmem:[#allocation5 + $0x4] sm:$0xf]
    %v46 = vld [vmem:[#allocation5 + $0x8] sm:$0xf]
    %v47 = vld [vmem:[#allocation5 + $0xc] sm:$0xf]
    %v48 = vld [vmem:[#allocation5 + $0x10] sm:$0xf]
    %v49 = vld [vmem:[#allocation5 + $0x14] sm:$0xf]
    %v50 = vld [vmem:[#allocation5 + $0x18] sm:$0xf]
    %v51 = vld [vmem:[#allocation5 + $0x1c] sm:$0xf]
    %v52 = vld [vmem:[#allocation5 + $0x20] sm:$0xf]
    %v53 = vld [vmem:[#allocation5 + $0x24] sm:$0xf]
    %v54 = vld [vmem:[#allocation5 + $0x28] sm:$0xf]
    %v55 = vld [vmem:[#allocation5 + $0x2c] sm:$0xf]
    %v56 = vld [vmem:[#allocation5 + $0x30] sm:$0xf]
    %v57 = vld [vmem:[#allocation5 + $0x34] sm:$0xf]
    %v58 = vld [vmem:[#allocation5 + $0x38] sm:$0xf]
    %v59 = vld [vmem:[#allocation5 + $0x3c] sm:$0xf]
    %v60 = vld [vmem:[%s2] sm:$0x1]
    %v62 = vlaneseq
    %v63 = vshrl.u32 %v62, 7
    %v64 = vsub.s32 0, %v63
    %v65 = vrot.slane %v60, %v64
    %v83 = vunpack.c.l.b16 %v44
    %v84 = vunpack.c.l.b16 %v45
    %v85 = vunpack.c.l.b16 %v46
    %v86 = vunpack.c.l.b16 %v47
    %v87 = vunpack.c.l.b16 %v48
    %v88 = vunpack.c.l.b16 %v49
    %v89 = vunpack.c.l.b16 %v50
    %v90 = vunpack.c.l.b16 %v51
    %v91 = vunpack.c.l.b16 %v52
    %v92 = vunpack.c.l.b16 %v53
    %v93 = vunpack.c.l.b16 %v54
    %v94 = vunpack.c.l.b16 %v55
    %v95 = vunpack.c.l.b16 %v56
    %v96 = vunpack.c.l.b16 %v57
    %v97 = vunpack.c.l.b16 %v58
    %v98 = vunpack.c.l.b16 %v59
    %v99 = vpack.c.b16 %v84, %v83
    %v100 = vpack.c.b16 %v86, %v85
    %v101 = vpack.c.b16 %v88, %v87
    %v102 = vpack.c.b16 %v90, %v89
    %v103 = vpack.c.b16 %v92, %v91
    %v104 = vpack.c.b16 %v94, %v93
    %v105 = vpack.c.b16 %v96, %v95
    %v106 = vpack.c.b16 %v98, %v97
    %115 = vmatprep.subr.bf16.mxu0 0
    %116 = vmatpush1.bf16.msra.mxu0 %v99
    %117 = vmatprep.subr.bf16.mxu0 0
    %118 = vmatpush1.bf16.msra.mxu0 %v100
    %119 = vmatprep.subr.bf16.mxu0 0
    %120 = vmatpush1.bf16.msra.mxu0 %v101
    %121 = vmatprep.subr.bf16.mxu0 0
    %122 = vmatpush1.bf16.msra.mxu0 %v102
    %123 = vmatprep.subr.bf16.mxu0 0
    %124 = vmatpush1.bf16.msra.mxu0 %v103
    %125 = vmatprep.subr.bf16.mxu0 0
    %126 = vmatpush1.bf16.msra.mxu0 %v104
    %127 = vmatprep.subr.bf16.mxu0 0
    %128 = vmatpush1.bf16.msra.mxu0 %v105
    %129 = vmatprep.subr.bf16.mxu0 0
    %130 = vmatpush1.bf16.msra.mxu0 %v106
    %131 = vmatprep.subr.bf16.mxu0 0
    %132 = vmatpush1.bf16.msra.mxu0 0
    %133 = vmatprep.subr.bf16.mxu0 0
    %134 = vmatpush1.bf16.msra.mxu0 0
    %135 = vmatprep.subr.bf16.mxu0 0
    %136 = vmatpush1.bf16.msra.mxu0 0
    %137 = vmatprep.subr.bf16.mxu0 0
    %138 = vmatpush1.bf16.msra.mxu0 0
    %139 = vmatprep.subr.bf16.mxu0 0
    %140 = vmatpush1.bf16.msra.mxu0 0
    %141 = vmatprep.subr.bf16.mxu0 0
    %142 = vmatpush1.bf16.msra.mxu0 0
    %143 = vmatprep.subr.bf16.mxu0 0
    %144 = vmatpush1.bf16.msra.mxu0 0
    %145 = vmatprep.subr.bf16.mxu0 0
    %146 = vmatpush1.bf16.msra.mxu0 0
    %147 = vmatprep.mubr.bf16.mxu0 0
    %148 = vmatmul.mubr.bf16.gmra.mrb[0].mxu0 %v43
    %v149 = vpop.f32.mrb[0].mxu0
    %v150 = vadd.f32 %v65, %v149
    %v151 = vpop.f32.mrb[0].mxu0
    %v152 = vpop.f32.mrb[0].mxu0
    %v153 = vpop.f32.mrb[0].mxu0
    %154 = vdwg.mxu0
    %155 = vmax.xlane.f32.xlu0 %v150
    %v156 = vpop.xlane.xlu0 %155
    %v157 = vsub.f32 %v150, %v156
    %v158 = vmul.f32 %v157, 1.442695
    %v159 = vpow.pop %v158
    %160 = vadd.xlane.f32.xlu0 %v159
    %v161 = vpop.xlane.xlu0 %160
    %v162 = vlog2.pop %v161
    %v163 = vmul.f32 %v162, 0.6931472
    %v164 = vsub.f32 %v157, %v163
    %165 = vst [vmem:[#allocation7] sm:$0xff] %v164
    // Predicated region
    $region22: #{tpu_custom_call.1} parent=1 // pred_check
      _
    $region23: #{tpu_custom_call.1} parent=1 // pred_check_branch
      %167 = sbr.rel (0) target = $region25
    $region24: #{tpu_custom_call.1} parent=1 // pred_region
      %s169 = ssub.s32 128, 128
      %170 = vsyncadd [#allocation4], %s169
      %s172 = sshll.u32 [#allocation7], 4
      %s173 = int_to_ptr.vmem [resolvable:$true] %s172
      %175 = dma.vmem_to_hbm [thread:$0]  %s173, 128, %s3, [#allocation4]
    $region25: #{tpu_custom_call.1} parent=1 // pred_fallthru
      _
    // Predicated region
    $region26: #{tpu_custom_call.1} parent=1 // pred_check
      _
    $region27: #{tpu_custom_call.1} parent=1 // pred_check_branch
      %177 = sbr.rel (0) target = $region29
    $region28: #{tpu_custom_call.1} parent=1 // pred_region
      %178 = dma.done [#allocation4], 128
    $region29: #{tpu_custom_call.1} parent=1 // pred_fallthru
      _
    %179 = vsyncpa [#allocation3], 1
    %180 = vsyncpa [#allocation6], 1
    %181 = vsyncpa [#allocation4], 1

</llo_original>
